<compile_context>
chip_gen: v5e
topology: v5e:2x2
jax: 0.10.0
libtpu: 0.0.40
codegen_flags: <defaults>
</compile_context>

<pallas_src>
import functools
import math

import jax
import jax.numpy as jnp
from jax.experimental import pallas as pl
from jax.experimental.pallas import tpu as pltpu


_MAX_TOK_BLOCK = 128           # rows per grid step (sublane-dense, >= 8)
_SMALL_TABLE_BYTES = 8 << 20   # tables up to this size go VMEM-resident


def _round_up(x, m):
    return ((x + m - 1) // m) * m


def _resident_embed_kernel(tok_ref, emb_ref, out_ref, *, tok_block, scale):
    # tok_ref: SMEM (N_pad,) int32 token ids (scalar-prefetched)
    # emb_ref: VMEM (V, E) full embedding table (resident across grid steps)
    # out_ref: VMEM (tok_block, E) output tile for this grid step
    base = pl.program_id(0) * tok_block
    for r in range(tok_block):
        tok = tok_ref[base + r]                              # scalar id (SMEM)
        row = emb_ref[pl.ds(tok, 1), :].astype(jnp.float32)  # (1, E) dynamic row
        out_ref[pl.ds(r, 1), :] = (row * scale).astype(out_ref.dtype)


def _gather_embed_kernel(tok_ref, emb_hbm, out_ref, buf, sem, *, tok_block, scale):
    # tok_ref: SMEM (N_pad,) int32 token ids (scalar-prefetched)
    # emb_hbm: HBM (V, E) embedding table (memory_space=pl.ANY)
    # out_ref: VMEM (tok_block, E) output tile
    # buf:     VMEM (2, tok_block, E) double-buffered row-gather scratch
    # sem:     DMA semaphores, one per buffer slot
    i = pl.program_id(0)
    nsteps = pl.num_programs(0)
    slot = i % 2

    def issue_block(step, slot_idx):
        base = step * tok_block
        for r in range(tok_block):
            tok = tok_ref[base + r]
            pltpu.make_async_copy(
                emb_hbm.at[pl.ds(tok, 1)],          # (1, E) row in HBM
                buf.at[slot_idx, pl.ds(r, 1)],      # (1, E) slot in scratch
                sem.at[slot_idx],
            ).start()

    # Prime the pipeline: gather block 0 into slot 0 on the first step.
    @pl.when(i == 0)
    def _():
        issue_block(0, 0)

    # Prefetch the next token block into the other slot while this one lands.
    @pl.when(i + 1 < nsteps)
    def _():
        issue_block(i + 1, 1 - slot)

    # Wait for this block's rows (all copies target sem[slot], equal sizes).
    for r in range(tok_block):
        pltpu.make_async_copy(
            emb_hbm.at[pl.ds(0, 1)],
            buf.at[slot, pl.ds(r, 1)],
            sem.at[slot],
        ).wait()

    out_ref[...] = (buf[slot].astype(jnp.float32) * scale).astype(out_ref.dtype)


def token_embedding(tokens, emb_table, *, force_path=None, tok_block=None):
    """Equivalent of TokenEmbedding.forward: embedding(tokens.long()) * sqrt(emb_size)."""
    B, S = tokens.shape
    V, E = emb_table.shape
    scale = math.sqrt(float(E))
    itemsize = jnp.dtype(emb_table.dtype).itemsize

    # tokens.long() equivalent + clamp so an out-of-range id never OOB-DMAs.
    flat = jnp.clip(tokens.reshape(-1).astype(jnp.int32), 0, V - 1)
    N = flat.shape[0]

    if tok_block is None:
        tok_block = min(_MAX_TOK_BLOCK, _round_up(N, 8))
    tok_block = max(8, _round_up(int(tok_block), 8))
    n_pad = _round_up(N, tok_block)
    if n_pad != N:
        flat = jnp.concatenate([flat, jnp.zeros((n_pad - N,), jnp.int32)])
    num_blocks = n_pad // tok_block

    table_bytes = V * E * itemsize
    if force_path is None:
        path = "resident" if table_bytes <= _SMALL_TABLE_BYTES else "gather"
    else:
        path = force_path

    out_buf_bytes = 2 * tok_block * E * itemsize  # double-buffered output tile

    if path == "resident":
        kernel = functools.partial(_resident_embed_kernel,
                                   tok_block=tok_block, scale=scale)
        vmem_needed = table_bytes + out_buf_bytes + (2 << 20)
        grid_spec = pltpu.PrefetchScalarGridSpec(
            num_scalar_prefetch=1,
            grid=(num_blocks,),
            in_specs=[pl.BlockSpec((V, E), lambda i, tok: (0, 0))],
            out_specs=pl.BlockSpec((tok_block, E), lambda i, tok: (i, 0)),
        )
        compiler_params = pltpu.CompilerParams(
            # Each grid step writes a disjoint output tile -> shard across TCs.
            dimension_semantics=("parallel",),
            vmem_limit_bytes=int(min(48 << 20, max(16 << 20, vmem_needed))),
        )
    elif path == "gather":
        kernel = functools.partial(_gather_embed_kernel,
                                   tok_block=tok_block, scale=scale)
        vmem_needed = 2 * tok_block * E * itemsize + out_buf_bytes + (2 << 20)
        grid_spec = pltpu.PrefetchScalarGridSpec(
            num_scalar_prefetch=1,
            grid=(num_blocks,),
            in_specs=[pl.BlockSpec(memory_space=pl.ANY)],   # table stays in HBM
            out_specs=pl.BlockSpec((tok_block, E), lambda i, tok: (i, 0)),
            scratch_shapes=[
                pltpu.VMEM((2, tok_block, E), emb_table.dtype),
                pltpu.SemaphoreType.DMA((2,)),
            ],
        )
        compiler_params = pltpu.CompilerParams(
            # The double buffer carries state across steps -> sequential grid.
            dimension_semantics=("arbitrary",),
            vmem_limit_bytes=int(min(48 << 20, max(16 << 20, vmem_needed))),
        )
    else:
        raise ValueError(f"unknown path: {path!r}")

    out_flat = pl.pallas_call(
        kernel,
        out_shape=jax.ShapeDtypeStruct((n_pad, E), emb_table.dtype),
        grid_spec=grid_spec,
        compiler_params=compiler_params,
        cost_estimate=pl.CostEstimate(
            flops=n_pad * E,
            transcendentals=0,
            bytes_accessed=2 * n_pad * E * itemsize + n_pad * 4,
        ),
    )(flat, emb_table)

    return out_flat[:N].reshape(B, S, E)


def init_token_embedding_params(key, vocab_size, emb_size, pad_token_id=1):
    # nn.Embedding default init: N(0, 1); padding_idx row zeroed.
    table = jax.random.normal(key, (vocab_size, emb_size), dtype=jnp.float32)
    table = table.at[pad_token_id].set(0.0)
    return table
    # TODO(synk): padding_idx also freezes that row's gradient during training;
    # only the forward (zeroed row) is reproduced here.


if __name__ == "__main__":
    key = jax.random.PRNGKey(0)
    k_emb, k_tok = jax.random.split(key)

    VOCAB, EMB = 64, 128
    B, S = 2, 8
    PAD = 1

    emb_table = init_token_embedding_params(k_emb, VOCAB, EMB, pad_token_id=PAD)
    tokens = jax.random.randint(k_tok, (B, S), 0, VOCAB, dtype=jnp.int32)
    tokens = tokens.at[0, 0].set(PAD)   # exercise the zeroed padding row

    ref = jnp.take(emb_table, tokens, axis=0) * math.sqrt(float(EMB))

    # Default dispatch: small table -> VMEM-resident path (single grid step).
    out = jax.block_until_ready(token_embedding(tokens, emb_table))
    assert out.shape == (B, S, EMB)
    assert jnp.allclose(out, ref, atol=1e-6, rtol=1e-6)

    # Resident path with multiple grid steps (exercises blocking/padding).
    out_r = jax.block_until_ready(token_embedding(tokens, emb_table, tok_block=8))
    assert jnp.allclose(out_r, ref, atol=1e-6, rtol=1e-6)

    # Large-table HBM gather path, forced at small shape with 2 grid steps to
    # exercise the double-buffered manual-DMA pipeline.
    out_g = jax.block_until_ready(
        token_embedding(tokens, emb_table, force_path="gather", tok_block=8))
    assert jnp.allclose(out_g, ref, atol=1e-6, rtol=1e-6)

    print("KERNEL_OK")
</pallas_src>

<mosaic_0001>
module attributes {stable_mosaic.version = 11 : i64} {
  func.func @_resident_embed_kernel(%arg0: i32, %arg1: memref<16xi32, #tpu.memory_space<smem>>, %arg2: memref<64x128xf32, #tpu.memory_space<vmem>>, %arg3: memref<16x128xf32, #tpu.memory_space<vmem>>) attributes {dimension_semantics = [#tpu.dimension_semantics<parallel>], iteration_bounds = array<i64: 1>, scalar_prefetch = 1 : i64, scratch_operands = 0 : i64, tpu.core_type = #tpu.core_type<tc>, window_params = [{pipeline_mode = #tpu.pipeline_mode<synchronous>, transform_indices = @transform_0, window_bounds = array<i64: 64, 128>}, {transform_indices = @transform_1, window_bounds = array<i64: 16, 128>}]} {
    %c16_i32 = arith.constant 16 : i32
    %0 = arith.muli %arg0, %c16_i32 : i32
    %c0_i32 = arith.constant 0 : i32
    %1 = arith.addi %0, %c0_i32 : i32
    %2 = arith.index_cast %1 : i32 to index
    %3 = memref.load %arg1[%2] : memref<16xi32, #tpu.memory_space<smem>>
    %4 = arith.index_cast %3 : i32 to index
    %c0 = arith.constant 0 : index
    %5 = vector.load %arg2[%4, %c0] : memref<64x128xf32, #tpu.memory_space<vmem>>, vector<1x128xf32>
    %cst = arith.constant 11.3137083 : f32
    %6 = vector.broadcast %cst : f32 to vector<1x128xf32>
    %7 = arith.mulf %5, %6 : vector<1x128xf32>
    %c0_0 = arith.constant 0 : index
    %c0_1 = arith.constant 0 : index
    %8 = vector.load %arg3[%c0_0, %c0_1] : memref<16x128xf32, #tpu.memory_space<vmem>>, vector<1x128xf32>
    tpu.vector_store %arg3[%c0_0, %c0_1], %7 {strides = array<i32>} : memref<16x128xf32, #tpu.memory_space<vmem>>, vector<1x128xf32>,
    %c1_i32 = arith.constant 1 : i32
    %9 = arith.addi %0, %c1_i32 : i32
    %10 = arith.index_cast %9 : i32 to index
    %11 = memref.load %arg1[%10] : memref<16xi32, #tpu.memory_space<smem>>
    %12 = arith.index_cast %11 : i32 to index
    %c0_2 = arith.constant 0 : index
    %13 = vector.load %arg2[%12, %c0_2] : memref<64x128xf32, #tpu.memory_space<vmem>>, vector<1x128xf32>
    %cst_3 = arith.constant 11.3137083 : f32
    %14 = vector.broadcast %cst_3 : f32 to vector<1x128xf32>
    %15 = arith.mulf %13, %14 : vector<1x128xf32>
    %c1 = arith.constant 1 : index
    %c0_4 = arith.constant 0 : index
    %16 = vector.load %arg3[%c1, %c0_4] : memref<16x128xf32, #tpu.memory_space<vmem>>, vector<1x128xf32>
    tpu.vector_store %arg3[%c1, %c0_4], %15 {strides = array<i32>} : memref<16x128xf32, #tpu.memory_space<vmem>>, vector<1x128xf32>,
    %c2_i32 = arith.constant 2 : i32
    %17 = arith.addi %0, %c2_i32 : i32
    %18 = arith.index_cast %17 : i32 to index
    %19 = memref.load %arg1[%18] : memref<16xi32, #tpu.memory_space<smem>>
    %20 = arith.index_cast %19 : i32 to index
    %c0_5 = arith.constant 0 : index
    %21 = vector.load %arg2[%20, %c0_5] : memref<64x128xf32, #tpu.memory_space<vmem>>, vector<1x128xf32>
    %cst_6 = arith.constant 11.3137083 : f32
    %22 = vector.broadcast %cst_6 : f32 to vector<1x128xf32>
    %23 = arith.mulf %21, %22 : vector<1x128xf32>
    %c2 = arith.constant 2 : index
    %c0_7 = arith.constant 0 : index
    %24 = vector.load %arg3[%c2, %c0_7] : memref<16x128xf32, #tpu.memory_space<vmem>>, vector<1x128xf32>
    tpu.vector_store %arg3[%c2, %c0_7], %23 {strides = array<i32>} : memref<16x128xf32, #tpu.memory_space<vmem>>, vector<1x128xf32>,
    %c3_i32 = arith.constant 3 : i32
    %25 = arith.addi %0, %c3_i32 : i32
    %26 = arith.index_cast %25 : i32 to index
    %27 = memref.load %arg1[%26] : memref<16xi32, #tpu.memory_space<smem>>
    %28 = arith.index_cast %27 : i32 to index
    %c0_8 = arith.constant 0 : index
    %29 = vector.load %arg2[%28, %c0_8] : memref<64x128xf32, #tpu.memory_space<vmem>>, vector<1x128xf32>
    %cst_9 = arith.constant 11.3137083 : f32
    %30 = vector.broadcast %cst_9 : f32 to vector<1x128xf32>
    %31 = arith.mulf %29, %30 : vector<1x128xf32>
    %c3 = arith.constant 3 : index
    %c0_10 = arith.constant 0 : index
    %32 = vector.load %arg3[%c3, %c0_10] : memref<16x128xf32, #tpu.memory_space<vmem>>, vector<1x128xf32>
    tpu.vector_store %arg3[%c3, %c0_10], %31 {strides = array<i32>} : memref<16x128xf32, #tpu.memory_space<vmem>>, vector<1x128xf32>,
    %c4_i32 = arith.constant 4 : i32
    %33 = arith.addi %0, %c4_i32 : i32
    %34 = arith.index_cast %33 : i32 to index
    %35 = memref.load %arg1[%34] : memref<16xi32, #tpu.memory_space<smem>>
    %36 = arith.index_cast %35 : i32 to index
    %c0_11 = arith.constant 0 : index
    %37 = vector.load %arg2[%36, %c0_11] : memref<64x128xf32, #tpu.memory_space<vmem>>, vector<1x128xf32>
    %cst_12 = arith.constant 11.3137083 : f32
    %38 = vector.broadcast %cst_12 : f32 to vector<1x128xf32>
    %39 = arith.mulf %37, %38 : vector<1x128xf32>
    %c4 = arith.constant 4 : index
    %c0_13 = arith.constant 0 : index
    %40 = vector.load %arg3[%c4, %c0_13] : memref<16x128xf32, #tpu.memory_space<vmem>>, vector<1x128xf32>
    tpu.vector_store %arg3[%c4, %c0_13], %39 {strides = array<i32>} : memref<16x128xf32, #tpu.memory_space<vmem>>, vector<1x128xf32>,
    %c5_i32 = arith.constant 5 : i32
    %41 = arith.addi %0, %c5_i32 : i32
    %42 = arith.index_cast %41 : i32 to index
    %43 = memref.load %arg1[%42] : memref<16xi32, #tpu.memory_space<smem>>
    %44 = arith.index_cast %43 : i32 to index
    %c0_14 = arith.constant 0 : index
    %45 = vector.load %arg2[%44, %c0_14] : memref<64x128xf32, #tpu.memory_space<vmem>>, vector<1x128xf32>
    %cst_15 = arith.constant 11.3137083 : f32
    %46 = vector.broadcast %cst_15 : f32 to vector<1x128xf32>
    %47 = arith.mulf %45, %46 : vector<1x128xf32>
    %c5 = arith.constant 5 : index
    %c0_16 = arith.constant 0 : index
    %48 = vector.load %arg3[%c5, %c0_16] : memref<16x128xf32, #tpu.memory_space<vmem>>, vector<1x128xf32>
    tpu.vector_store %arg3[%c5, %c0_16], %47 {strides = array<i32>} : memref<16x128xf32, #tpu.memory_space<vmem>>, vector<1x128xf32>,
    %c6_i32 = arith.constant 6 : i32
    %49 = arith.addi %0, %c6_i32 : i32
    %50 = arith.index_cast %49 : i32 to index
    %51 = memref.load %arg1[%50] : memref<16xi32, #tpu.memory_space<smem>>
    %52 = arith.index_cast %51 : i32 to index
    %c0_17 = arith.constant 0 : index
    %53 = vector.load %arg2[%52, %c0_17] : memref<64x128xf32, #tpu.memory_space<vmem>>, vector<1x128xf32>
    %cst_18 = arith.constant 11.3137083 : f32
    %54 = vector.broadcast %cst_18 : f32 to vector<1x128xf32>
    %55 = arith.mulf %53, %54 : vector<1x128xf32>
    %c6 = arith.constant 6 : index
    %c0_19 = arith.constant 0 : index
    %56 = vector.load %arg3[%c6, %c0_19] : memref<16x128xf32, #tpu.memory_space<vmem>>, vector<1x128xf32>
    tpu.vector_store %arg3[%c6, %c0_19], %55 {strides = array<i32>} : memref<16x128xf32, #tpu.memory_space<vmem>>, vector<1x128xf32>,
    %c7_i32 = arith.constant 7 : i32
    %57 = arith.addi %0, %c7_i32 : i32
    %58 = arith.index_cast %57 : i32 to index
    %59 = memref.load %arg1[%58] : memref<16xi32, #tpu.memory_space<smem>>
    %60 = arith.index_cast %59 : i32 to index
    %c0_20 = arith.constant 0 : index
    %61 = vector.load %arg2[%60, %c0_20] : memref<64x128xf32, #tpu.memory_space<vmem>>, vector<1x128xf32>
    %cst_21 = arith.constant 11.3137083 : f32
    %62 = vector.broadcast %cst_21 : f32 to vector<1x128xf32>
    %63 = arith.mulf %61, %62 : vector<1x128xf32>
    %c7 = arith.constant 7 : index
    %c0_22 = arith.constant 0 : index
    %64 = vector.load %arg3[%c7, %c0_22] : memref<16x128xf32, #tpu.memory_space<vmem>>, vector<1x128xf32>
    tpu.vector_store %arg3[%c7, %c0_22], %63 {strides = array<i32>} : memref<16x128xf32, #tpu.memory_space<vmem>>, vector<1x128xf32>,
    %c8_i32 = arith.constant 8 : i32
    %65 = arith.addi %0, %c8_i32 : i32
    %66 = arith.index_cast %65 : i32 to index
    %67 = memref.load %arg1[%66] : memref<16xi32, #tpu.memory_space<smem>>
    %68 = arith.index_cast %67 : i32 to index
    %c0_23 = arith.constant 0 : index
    %69 = vector.load %arg2[%68, %c0_23] : memref<64x128xf32, #tpu.memory_space<vmem>>, vector<1x128xf32>
    %cst_24 = arith.constant 11.3137083 : f32
    %70 = vector.broadcast %cst_24 : f32 to vector<1x128xf32>
    %71 = arith.mulf %69, %70 : vector<1x128xf32>
    %c8 = arith.constant 8 : index
    %c0_25 = arith.constant 0 : index
    %72 = vector.load %arg3[%c8, %c0_25] : memref<16x128xf32, #tpu.memory_space<vmem>>, vector<1x128xf32>
    tpu.vector_store %arg3[%c8, %c0_25], %71 {strides = array<i32>} : memref<16x128xf32, #tpu.memory_space<vmem>>, vector<1x128xf32>,
    %c9_i32 = arith.constant 9 : i32
    %73 = arith.addi %0, %c9_i32 : i32
    %74 = arith.index_cast %73 : i32 to index
    %75 = memref.load %arg1[%74] : memref<16xi32, #tpu.memory_space<smem>>
    %76 = arith.index_cast %75 : i32 to index
    %c0_26 = arith.constant 0 : index
    %77 = vector.load %arg2[%76, %c0_26] : memref<64x128xf32, #tpu.memory_space<vmem>>, vector<1x128xf32>
    %cst_27 = arith.constant 11.3137083 : f32
    %78 = vector.broadcast %cst_27 : f32 to vector<1x128xf32>
    %79 = arith.mulf %77, %78 : vector<1x128xf32>
    %c9 = arith.constant 9 : index
    %c0_28 = arith.constant 0 : index
    %80 = vector.load %arg3[%c9, %c0_28] : memref<16x128xf32, #tpu.memory_space<vmem>>, vector<1x128xf32>
    tpu.vector_store %arg3[%c9, %c0_28], %79 {strides = array<i32>} : memref<16x128xf32, #tpu.memory_space<vmem>>, vector<1x128xf32>,
    %c10_i32 = arith.constant 10 : i32
    %81 = arith.addi %0, %c10_i32 : i32
    %82 = arith.index_cast %81 : i32 to index
    %83 = memref.load %arg1[%82] : memref<16xi32, #tpu.memory_space<smem>>
    %84 = arith.index_cast %83 : i32 to index
    %c0_29 = arith.constant 0 : index
    %85 = vector.load %arg2[%84, %c0_29] : memref<64x128xf32, #tpu.memory_space<vmem>>, vector<1x128xf32>
    %cst_30 = arith.constant 11.3137083 : f32
    %86 = vector.broadcast %cst_30 : f32 to vector<1x128xf32>
    %87 = arith.mulf %85, %86 : vector<1x128xf32>
    %c10 = arith.constant 10 : index
    %c0_31 = arith.constant 0 : index
    %88 = vector.load %arg3[%c10, %c0_31] : memref<16x128xf32, #tpu.memory_space<vmem>>, vector<1x128xf32>
    tpu.vector_store %arg3[%c10, %c0_31], %87 {strides = array<i32>} : memref<16x128xf32, #tpu.memory_space<vmem>>, vector<1x128xf32>,
    %c11_i32 = arith.constant 11 : i32
    %89 = arith.addi %0, %c11_i32 : i32
    %90 = arith.index_cast %89 : i32 to index
    %91 = memref.load %arg1[%90] : memref<16xi32, #tpu.memory_space<smem>>
    %92 = arith.index_cast %91 : i32 to index
    %c0_32 = arith.constant 0 : index
    %93 = vector.load %arg2[%92, %c0_32] : memref<64x128xf32, #tpu.memory_space<vmem>>, vector<1x128xf32>
    %cst_33 = arith.constant 11.3137083 : f32
    %94 = vector.broadcast %cst_33 : f32 to vector<1x128xf32>
    %95 = arith.mulf %93, %94 : vector<1x128xf32>
    %c11 = arith.constant 11 : index
    %c0_34 = arith.constant 0 : index
    %96 = vector.load %arg3[%c11, %c0_34] : memref<16x128xf32, #tpu.memory_space<vmem>>, vector<1x128xf32>
    tpu.vector_store %arg3[%c11, %c0_34], %95 {strides = array<i32>} : memref<16x128xf32, #tpu.memory_space<vmem>>, vector<1x128xf32>,
    %c12_i32 = arith.constant 12 : i32
    %97 = arith.addi %0, %c12_i32 : i32
    %98 = arith.index_cast %97 : i32 to index
    %99 = memref.load %arg1[%98] : memref<16xi32, #tpu.memory_space<smem>>
    %100 = arith.index_cast %99 : i32 to index
    %c0_35 = arith.constant 0 : index
    %101 = vector.load %arg2[%100, %c0_35] : memref<64x128xf32, #tpu.memory_space<vmem>>, vector<1x128xf32>
    %cst_36 = arith.constant 11.3137083 : f32
    %102 = vector.broadcast %cst_36 : f32 to vector<1x128xf32>
    %103 = arith.mulf %101, %102 : vector<1x128xf32>
    %c12 = arith.constant 12 : index
    %c0_37 = arith.constant 0 : index
    %104 = vector.load %arg3[%c12, %c0_37] : memref<16x128xf32, #tpu.memory_space<vmem>>, vector<1x128xf32>
    tpu.vector_store %arg3[%c12, %c0_37], %103 {strides = array<i32>} : memref<16x128xf32, #tpu.memory_space<vmem>>, vector<1x128xf32>,
    %c13_i32 = arith.constant 13 : i32
    %105 = arith.addi %0, %c13_i32 : i32
    %106 = arith.index_cast %105 : i32 to index
    %107 = memref.load %arg1[%106] : memref<16xi32, #tpu.memory_space<smem>>
    %108 = arith.index_cast %107 : i32 to index
    %c0_38 = arith.constant 0 : index
    %109 = vector.load %arg2[%108, %c0_38] : memref<64x128xf32, #tpu.memory_space<vmem>>, vector<1x128xf32>
    %cst_39 = arith.constant 11.3137083 : f32
    %110 = vector.broadcast %cst_39 : f32 to vector<1x128xf32>
    %111 = arith.mulf %109, %110 : vector<1x128xf32>
    %c13 = arith.constant 13 : index
    %c0_40 = arith.constant 0 : index
    %112 = vector.load %arg3[%c13, %c0_40] : memref<16x128xf32, #tpu.memory_space<vmem>>, vector<1x128xf32>
    tpu.vector_store %arg3[%c13, %c0_40], %111 {strides = array<i32>} : memref<16x128xf32, #tpu.memory_space<vmem>>, vector<1x128xf32>,
    %c14_i32 = arith.constant 14 : i32
    %113 = arith.addi %0, %c14_i32 : i32
    %114 = arith.index_cast %113 : i32 to index
    %115 = memref.load %arg1[%114] : memref<16xi32, #tpu.memory_space<smem>>
    %116 = arith.index_cast %115 : i32 to index
    %c0_41 = arith.constant 0 : index
    %117 = vector.load %arg2[%116, %c0_41] : memref<64x128xf32, #tpu.memory_space<vmem>>, vector<1x128xf32>
    %cst_42 = arith.constant 11.3137083 : f32
    %118 = vector.broadcast %cst_42 : f32 to vector<1x128xf32>
    %119 = arith.mulf %117, %118 : vector<1x128xf32>
    %c14 = arith.constant 14 : index
    %c0_43 = arith.constant 0 : index
    %120 = vector.load %arg3[%c14, %c0_43] : memref<16x128xf32, #tpu.memory_space<vmem>>, vector<1x128xf32>
    tpu.vector_store %arg3[%c14, %c0_43], %119 {strides = array<i32>} : memref<16x128xf32, #tpu.memory_space<vmem>>, vector<1x128xf32>,
    %c15_i32 = arith.constant 15 : i32
    %121 = arith.addi %0, %c15_i32 : i32
    %122 = arith.index_cast %121 : i32 to index
    %123 = memref.load %arg1[%122] : memref<16xi32, #tpu.memory_space<smem>>
    %124 = arith.index_cast %123 : i32 to index
    %c0_44 = arith.constant 0 : index
    %125 = vector.load %arg2[%124, %c0_44] : memref<64x128xf32, #tpu.memory_space<vmem>>, vector<1x128xf32>
    %cst_45 = arith.constant 11.3137083 : f32
    %126 = vector.broadcast %cst_45 : f32 to vector<1x128xf32>
    %127 = arith.mulf %125, %126 : vector<1x128xf32>
    %c15 = arith.constant 15 : index
    %c0_46 = arith.constant 0 : index
    %128 = vector.load %arg3[%c15, %c0_46] : memref<16x128xf32, #tpu.memory_space<vmem>>, vector<1x128xf32>
    tpu.vector_store %arg3[%c15, %c0_46], %127 {strides = array<i32>} : memref<16x128xf32, #tpu.memory_space<vmem>>, vector<1x128xf32>,
    return
  }
  func.func @transform_0(%arg0: i32, %arg1: memref<16xi32, #tpu.memory_space<smem>>) -> (i32, i32) {
    %c0_i32 = arith.constant 0 : i32
    %c0_i32_0 = arith.constant 0 : i32
    %c0_i32_1 = arith.constant 0 : i32
    return %c0_i32, %c0_i32_0 : i32, i32
  }
  func.func @transform_1(%arg0: i32, %arg1: memref<16xi32, #tpu.memory_space<smem>>) -> (i32, i32) {
    %c0_i32 = arith.constant 0 : i32
    %c0_i32_0 = arith.constant 0 : i32
    return %arg0, %c0_i32 : i32, i32
  }
}

</mosaic_0001>

<llo_original>
// kernel: tpu_custom_call.1
$region0: #{tpu_custom_call.1}
  #allocation0 [shape = 'u32[]', space=smem, size = 0x4, offset = 0x4, fixed_abs, tag = 'smem constant byte address 0x4 - core index']
  #allocation1 [shape = 'u32[72,128]{1,0:T(1,128)}', space=vmem, size = 0x9000, scoped, tag = 'internal scratch']
  #allocation2 [shape = 's32[1]{0}', space=sflag, size = 0x4, scoped, tag = 'scoped memory for tpu_custom_call.1']
  #allocation3 [shape = 'u8[512]{0}', space=smem, size = 0x200, scoped, tag = 'prefetched SMEM operand 0']
  %s0 = inlined_call_operand.hbm [shape: s32[16], index: 0, kind: input, shape index: {}]
  %s1 = inlined_call_operand.hbm [shape: f32[64,128], index: 1, kind: input, shape index: {}]
  %s2 = inlined_call_operand.hbm [shape: f32[16,128], index: 2, kind: output, shape index: {}]
  %s3 = sld [smem:[#allocation0]]
  $region18: #{tpu_custom_call.1} parent=0
    _
  %s5 = ssub.s32 1, %s3
  %s6 = scalar_select 0, %s5, %s3
  %s8 = sshll.u32 %s0, 4
  %s9 = int_to_ptr.hbm [resolvable:$true] %s8
  %11 = dma.hbm_to_smem %s9, 16, [#allocation3], [#allocation2]
  %13 = dma.done [#allocation2], 16
  %14 = sfence
  $region1: #{tpu_custom_call.1} parent=0
    #allocation4 [shape = 'u8[32768]{0}', space=vmem, size = 0x8000, scoped, tag = 'input window, operand 1, single buffered']
    #allocation5 [shape = 's32[1]{0}', space=sflag, size = 0x4, scoped, tag = 'scoped memory for tpu_custom_call.1']
    #allocation6 [shape = 's32[1]{0}', space=sflag, size = 0x4, scoped, tag = 'scoped memory for tpu_custom_call.1']
    #allocation7 [shape = 'u8[8192]{0}', space=vmem, size = 0x2000, scoped, tag = 'output window, operand 0, single buffered']
    %15 = vsyncpa [#allocation5], 0
    %16 = vsyncpa [#allocation6], 0
    // Predicated region
    $region2: #{tpu_custom_call.1} parent=1 // pred_check
      _
    $region3: #{tpu_custom_call.1} parent=1 // pred_check_branch
      %18 = sbr.rel (0) target = $region5
    $region4: #{tpu_custom_call.1} parent=1 // pred_region
      %20 = vsyncadd [#allocation5], 0
      %s21 = sshll.u32 %s1, 4
      %s22 = int_to_ptr.hbm [resolvable:$true] %s21
      %s23 = sshll.u32 [#allocation4], 4
      %s24 = int_to_ptr.vmem [resolvable:$true] %s23
      %29 = dma.hbm_to_vmem [thread:$0]  %s22, 1024, %s24, [#allocation5], 128, 128, 8
    $region5: #{tpu_custom_call.1} parent=1 // pred_fallthru
      _
    // Predicated region
    $region6: #{tpu_custom_call.1} parent=1 // pred_check
      _
    $region7: #{tpu_custom_call.1} parent=1 // pred_check_branch
      %31 = sbr.rel (0) target = $region9
    $region8: #{tpu_custom_call.1} parent=1 // pred_region
      %33 = dma.done [#allocation5], 1024
    $region9: #{tpu_custom_call.1} parent=1 // pred_fallthru
      _
    %s34 = smul.u32 0, 16
    %s35 = sld [smem:[#allocation3 + %s34]]
    %s36 = scalar_lea.vmem [#allocation4], %s35
    %v37 = vld [vmem:[%s36] sm:$0x1]
    %v38 = vmul.f32 %v37, 11.313708
    %39 = vst [vmem:[#allocation7] sm:$0x1] %v38
    %s40 = sadd.s32 %s34, 1
    %s41 = sld [smem:[#allocation3 + %s40]]
    %s42 = scalar_lea.vmem [#allocation4], %s41
    %v43 = vld [vmem:[%s42] sm:$0x1]
    %v44 = vmul.f32 %v43, 11.313708
    %45 = vst [vmem:[#allocation7 + $0x1] sm:$0x1] %v44
    %s46 = sadd.s32 %s34, 2
    %s47 = sld [smem:[#allocation3 + %s46]]
    %s48 = scalar_lea.vmem [#allocation4], %s47
    %v49 = vld [vmem:[%s48] sm:$0x1]
    %v50 = vmul.f32 %v49, 11.313708
    %51 = vst [vmem:[#allocation7 + $0x2] sm:$0x1] %v50
    %s52 = sadd.s32 %s34, 3
    %s53 = sld [smem:[#allocation3 + %s52]]
    %s54 = scalar_lea.vmem [#allocation4], %s53
    %v55 = vld [vmem:[%s54] sm:$0x1]
    %v56 = vmul.f32 %v55, 11.313708
    %57 = vst [vmem:[#allocation7 + $0x3] sm:$0x1] %v56
    %s58 = sadd.s32 %s34, 4
    %s59 = sld [smem:[#allocation3 + %s58]]
    %s60 = scalar_lea.vmem [#allocation4], %s59
    %v61 = vld [vmem:[%s60] sm:$0x1]
    %v62 = vmul.f32 %v61, 11.313708
    %63 = vst [vmem:[#allocation7 + $0x4] sm:$0x1] %v62
    %s64 = sadd.s32 %s34, 5
    %s65 = sld [smem:[#allocation3 + %s64]]
    %s66 = scalar_lea.vmem [#allocation4], %s65
    %v67 = vld [vmem:[%s66] sm:$0x1]
    %v68 = vmul.f32 %v67, 11.313708
    %69 = vst [vmem:[#allocation7 + $0x5] sm:$0x1] %v68
    %s70 = sadd.s32 %s34, 6
    %s71 = sld [smem:[#allocation3 + %s70]]
    %s72 = scalar_lea.vmem [#allocation4], %s71
    %v73 = vld [vmem:[%s72] sm:$0x1]
    %v74 = vmul.f32 %v73, 11.313708
    %75 = vst [vmem:[#allocation7 + $0x6] sm:$0x1] %v74
    %s76 = sadd.s32 %s34, 7
    %s77 = sld [smem:[#allocation3 + %s76]]
    %s78 = scalar_lea.vmem [#allocation4], %s77
    %v79 = vld [vmem:[%s78] sm:$0x1]
    %v80 = vmul.f32 %v79, 11.313708
    %81 = vst [vmem:[#allocation7 + $0x7] sm:$0x1] %v80
    %s82 = sadd.s32 %s34, 8
    %s83 = sld [smem:[#allocation3 + %s82]]
    %s84 = scalar_lea.vmem [#allocation4], %s83
    %v85 = vld [vmem:[%s84] sm:$0x1]
    %v86 = vmul.f32 %v85, 11.313708
    %87 = vst [vmem:[#allocation7 + $0x8] sm:$0x1] %v86
    %s88 = sadd.s32 %s34, 9
    %s89 = sld [smem:[#allocation3 + %s88]]
    %s90 = scalar_lea.vmem [#allocation4], %s89
    %v91 = vld [vmem:[%s90] sm:$0x1]
    %v92 = vmul.f32 %v91, 11.313708
    %93 = vst [vmem:[#allocation7 + $0x9] sm:$0x1] %v92
    %s94 = sadd.s32 %s34, 10
    %s95 = sld [smem:[#allocation3 + %s94]]
    %s96 = scalar_lea.vmem [#allocation4], %s95
    %v97 = vld [vmem:[%s96] sm:$0x1]
    %v98 = vmul.f32 %v97, 11.313708
    %99 = vst [vmem:[#allocation7 + $0xa] sm:$0x1] %v98
    %s100 = sadd.s32 %s34, 11
    %s101 = sld [smem:[#allocation3 + %s100]]
    %s102 = scalar_lea.vmem [#allocation4], %s101
    %v103 = vld [vmem:[%s102] sm:$0x1]
    %v104 = vmul.f32 %v103, 11.313708
    %105 = vst [vmem:[#allocation7 + $0xb] sm:$0x1] %v104
    %s106 = sadd.s32 %s34, 12
    %s107 = sld [smem:[#allocation3 + %s106]]
    %s108 = scalar_lea.vmem [#allocation4], %s107
    %v109 = vld [vmem:[%s108] sm:$0x1]
    %v110 = vmul.f32 %v109, 11.313708
    %111 = vst [vmem:[#allocation7 + $0xc] sm:$0x1] %v110
    %s112 = sadd.s32 %s34, 13
    %s113 = sld [smem:[#allocation3 + %s112]]
    %s114 = scalar_lea.vmem [#allocation4], %s113
    %v115 = vld [vmem:[%s114] sm:$0x1]
    %v116 = vmul.f32 %v115, 11.313708
    %117 = vst [vmem:[#allocation7 + $0xd] sm:$0x1] %v116
    %s118 = sadd.s32 %s34, 14
    %s119 = sld [smem:[#allocation3 + %s118]]
    %s120 = scalar_lea.vmem [#allocation4], %s119
    %v121 = vld [vmem:[%s120] sm:$0x1]
    %v122 = vmul.f32 %v121, 11.313708
    %123 = vst [vmem:[#allocation7 + $0xe] sm:$0x1] %v122
    %s124 = sadd.s32 %s34, 15
    %s125 = sld [smem:[#allocation3 + %s124]]
    %s126 = scalar_lea.vmem [#allocation4], %s125
    %v127 = vld [vmem:[%s126] sm:$0x1]
    %v128 = vmul.f32 %v127, 11.313708
    %129 = vst [vmem:[#allocation7 + $0xf] sm:$0x1] %v128
    // Predicated region
    $region10: #{tpu_custom_call.1} parent=1 // pred_check
      _
    $region11: #{tpu_custom_call.1} parent=1 // pred_check_branch
      %131 = sbr.rel (0) target = $region13
    $region12: #{tpu_custom_call.1} parent=1 // pred_region
      %133 = vsyncadd [#allocation6], 0
      %s134 = sshll.u32 [#allocation7], 4
      %s135 = int_to_ptr.vmem [resolvable:$true] %s134
      %s136 = sshll.u32 %s2, 4
      %s137 = int_to_ptr.hbm [resolvable:$true] %s136
      %142 = dma.vmem_to_hbm [thread:$0]  %s135, 256, %s137, [#allocation6], 128, 128, 8
    $region13: #{tpu_custom_call.1} parent=1 // pred_fallthru
      _
    // Predicated region
    $region14: #{tpu_custom_call.1} parent=1 // pred_check
      _
    $region15: #{tpu_custom_call.1} parent=1 // pred_check_branch
      %144 = sbr.rel (0) target = $region17
    $region16: #{tpu_custom_call.1} parent=1 // pred_region
      %146 = dma.done [#allocation6], 256
    $region17: #{tpu_custom_call.1} parent=1 // pred_fallthru
      _
    %147 = vsyncpa [#allocation5], 1
    %148 = vsyncpa [#allocation6], 1

</llo_original>
